<compile_context>
chip_gen: v7x
topology: tpu7x:2x2x1
jax: 0.10.0
libtpu: 0.0.40
codegen_flags: <defaults>
</compile_context>

<pallas_src>
import functools

import jax
import jax.numpy as jnp
from jax.experimental import pallas as pl
from jax.experimental.pallas import tpu as pltpu

_LANES = 128                 # vreg lane width: long axis goes here (lane-dense)
_SUBLANES = 8                # f32 sublane tile
_ROW_ALIGN = 16              # bf16-safe sublane alignment for block rows
_MAX_ROWS_PER_TILE = 2048    # 2048x128 f32 = 1 MiB per tile per input
_MIN_KERNEL_ELEMENTS = 256 * 1024


def _cdiv(a, b):
    return -(-a // b)


def _wdisc_sum_kernel(rows_real_ref, rows_fake_ref, real_ref, fake_ref,
                      racc_ref, facc_ref, *, rows_per_tile):
    """Accumulate per-(sublane,lane) partial sums of both operands.

    grid = (2, tiles_per_half): axis 0 is a 'parallel' core split (v7x has two
    TensorCores; v5e/v6e simply run it as a serial loop of two), axis 1 is the
    'arbitrary' streaming/reduction axis.
    """
    c = pl.program_id(0)                 # core-half
    t = pl.program_id(1)                 # row-tile within this half

    @pl.when(t == 0)
    def _init():
        racc_ref[...] = jnp.zeros_like(racc_ref)
        facc_ref[...] = jnp.zeros_like(facc_ref)

    # Global row-tile index and per-row validity mask.  The mask handles
    # (a) the partial last tile of each operand, (b) grid overhang from the
    # core split / odd tile counts, and (c) the smaller operand when
    # n_real != n_fake (its clamped index_map keeps presenting its last block,
    # which is fully masked out here, with no re-DMA).
    g = c * pl.num_programs(1) + t
    row0 = g * rows_per_tile
    row_ids = row0 + jax.lax.broadcasted_iota(
        jnp.int32, (rows_per_tile, _LANES), 0)

    # Accumulate in f32 regardless of input dtype (v5e has no bf16 VPU).
    real = real_ref[...].astype(jnp.float32)
    fake = fake_ref[...].astype(jnp.float32)
    real = jnp.where(row_ids < rows_real_ref[0], real, 0.0)
    fake = jnp.where(row_ids < rows_fake_ref[0], fake, 0.0)

    # (8,128) vreg-shaped accumulators: per-step work is pure VALU adds; the
    # final sublane+lane reduce happens once in the (tiny) wrapper epilogue.
    rsum = real.reshape(-1, _SUBLANES, _LANES).sum(axis=0)
    fsum = fake.reshape(-1, _SUBLANES, _LANES).sum(axis=0)
    racc_ref[...] += rsum[None]
    facc_ref[...] += fsum[None]


def _plain_loss(real, fake, penalty, lam):
    return (jnp.mean(fake.astype(jnp.float32))
            - jnp.mean(real.astype(jnp.float32))
            + jnp.float32(lam) * jnp.asarray(penalty, jnp.float32))


def _keep_or_f32(x):
    # Keep bf16/f32 as-is (bf16 halves HBM bytes); widen anything else.
    return x if x.dtype in (jnp.bfloat16, jnp.float32) else x.astype(jnp.float32)


def _bulk_and_tail_sum(x_flat, rows):
    """Zero-copy (rows,128) view of the 128-aligned prefix + f32 tail sum."""
    bulk_elems = rows * _LANES
    if bulk_elems == x_flat.shape[0]:
        return x_flat.reshape(rows, _LANES), jnp.float32(0.0)
    # Tail (<128 elements) is reduced by XLA; only in this (rare) non-divisible
    # case does the bulk slice cost one extra copy of the prefix.
    bulk = jax.lax.slice(x_flat, (0,), (bulk_elems,)).reshape(rows, _LANES)
    tail = jax.lax.slice(x_flat, (bulk_elems,), (x_flat.shape[0],))
    return bulk, jnp.sum(tail.astype(jnp.float32))


def wdisc_loss(d_real_prediction, d_fake_prediction, penalty,
               penalty_lambda=10.0, *, min_kernel_elements=_MIN_KERNEL_ELEMENTS,
               rows_per_tile=None):
    """JAX wrapper reproducing WDiscLoss.forward semantics."""
    real = jnp.asarray(d_real_prediction)
    fake = jnp.asarray(d_fake_prediction)
    n_real = int(real.size)
    n_fake = int(fake.size)
    rows_real = n_real // _LANES
    rows_fake = n_fake // _LANES

    # Small / degenerate critic batches (the common WGAN case: (batch,1)):
    # a fused XLA reduction is already at roofline and beats launch overhead.
    if (max(n_real, n_fake) < min_kernel_elements
            or min(rows_real, rows_fake) < _ROW_ALIGN):
        return _plain_loss(real, fake, penalty, penalty_lambda)

    real_flat = _keep_or_f32(real).reshape(-1)
    fake_flat = _keep_or_f32(fake).reshape(-1)

    # Lane-dense (rows,128) views -- no whole-array padding copy.
    real2d, real_tail = _bulk_and_tail_sum(real_flat, rows_real)
    fake2d, fake_tail = _bulk_and_tail_sum(fake_flat, rows_fake)

    # Tile rows: as large as VMEM comfortably allows, multiple of 16 sublanes
    # (bf16-safe), never exceeding either operand's row extent.
    cap = (min(rows_real, rows_fake) // _ROW_ALIGN) * _ROW_ALIGN
    if rows_per_tile is None:
        rows_per_tile = _MAX_ROWS_PER_TILE
    rows_per_tile = max(_ROW_ALIGN,
                        min((int(rows_per_tile) // _ROW_ALIGN) * _ROW_ALIGN, cap))

    num_tiles = _cdiv(max(rows_real, rows_fake), rows_per_tile)
    tiles_per_half = _cdiv(num_tiles, 2)
    last_blk_real = max(_cdiv(rows_real, rows_per_tile) - 1, 0)
    last_blk_fake = max(_cdiv(rows_fake, rows_per_tile) - 1, 0)

    def _clamped_map(last_blk):
        # Once the global tile index passes this operand's last block, the
        # returned block index stops changing, so Pallas skips the re-DMA.
        def idx(c, t):
            g = c * tiles_per_half + t
            return (jnp.minimum(g, last_blk), 0)
        return idx

    # 2 inputs x 2 pipeline buffers x tile_bytes + slack, 32..48 MiB window
    # (fits v5e/v6e scoped VMEM, stays well under v7x's 64 MiB physical).
    tile_bytes = rows_per_tile * _LANES * (real2d.dtype.itemsize
                                           + fake2d.dtype.itemsize)
    vmem_limit = int(min(48 * 2**20, max(32 * 2**20, 2 * tile_bytes + 2 * 2**20)))

    racc, facc = pl.pallas_call(
        functools.partial(_wdisc_sum_kernel, rows_per_tile=rows_per_tile),
        out_shape=(jax.ShapeDtypeStruct((2, _SUBLANES, _LANES), jnp.float32),
                   jax.ShapeDtypeStruct((2, _SUBLANES, _LANES), jnp.float32)),
        grid=(2, tiles_per_half),
        in_specs=[
            pl.BlockSpec(memory_space=pltpu.MemorySpace.SMEM),        # rows_real
            pl.BlockSpec(memory_space=pltpu.MemorySpace.SMEM),        # rows_fake
            pl.BlockSpec((rows_per_tile, _LANES), _clamped_map(last_blk_real)),
            pl.BlockSpec((rows_per_tile, _LANES), _clamped_map(last_blk_fake)),
        ],
        out_specs=(pl.BlockSpec((1, _SUBLANES, _LANES), lambda c, t: (c, 0, 0)),
                   pl.BlockSpec((1, _SUBLANES, _LANES), lambda c, t: (c, 0, 0))),
        compiler_params=pltpu.CompilerParams(
            dimension_semantics=("parallel", "arbitrary"),
            vmem_limit_bytes=vmem_limit),
    )(jnp.array([rows_real], jnp.int32),
      jnp.array([rows_fake], jnp.int32),
      real2d, fake2d)

    # Tiny wrapper epilogue: final 2x(2,8,128) reduce, true-N means, lambda *
    # penalty.  Keeping 1/N and penalty out of the kernel avoids any Mosaic
    # recompile sensitivity and any per-step scalar work.
    sum_real = jnp.sum(racc) + real_tail
    sum_fake = jnp.sum(facc) + fake_tail
    return (sum_fake / n_fake - sum_real / n_real
            + jnp.float32(penalty_lambda) * jnp.asarray(penalty, jnp.float32))


if __name__ == "__main__":
    key = jax.random.PRNGKey(0)
    k1, k2, k3, k4, k5, k6, k7 = jax.random.split(key, 7)

    def _ref(real, fake, penalty, lam=10.0):
        return (jnp.mean(fake.astype(jnp.float32))
                - jnp.mean(real.astype(jnp.float32))
                + lam * jnp.asarray(penalty, jnp.float32))

    penalty = jax.random.uniform(k3, (), dtype=jnp.float32)

    # Case 1: typical tiny critic output (batch, 1) -> fused XLA fallback path.
    d_real1 = jax.random.normal(k1, (8, 1), dtype=jnp.float32)
    d_fake1 = jax.random.normal(k2, (8, 1), dtype=jnp.float32)
    loss1 = jax.block_until_ready(wdisc_loss(d_real1, d_fake1, penalty, 10.0))
    assert jnp.allclose(loss1, _ref(d_real1, d_fake1, penalty),
                        atol=1e-5, rtol=1e-5), (loss1, _ref(d_real1, d_fake1, penalty))

    # Case 2: f32 critic outputs, Pallas path forced; 128-divisible sizes ->
    # zero-copy reshape, no tails, one tile per core-half.
    d_real2 = jax.random.normal(k4, (4096, 1), dtype=jnp.float32)
    d_fake2 = jax.random.normal(k5, (4096, 1), dtype=jnp.float32)
    loss2 = jax.block_until_ready(
        wdisc_loss(d_real2, d_fake2, penalty, 10.0, min_kernel_elements=0))
    assert jnp.allclose(loss2, _ref(d_real2, d_fake2, penalty),
                        atol=1e-4, rtol=1e-4), (loss2, _ref(d_real2, d_fake2, penalty))

    # Case 3: bf16, mismatched sizes with non-128-divisible tails and a forced
    # small tile -> exercises multi-tile accumulation, the partial boundary
    # block mask, and the clamped index_map for the smaller operand.
    d_real3 = jax.random.normal(k6, (20 * 128 + 37, 1), jnp.float32).astype(jnp.bfloat16)
    d_fake3 = jax.random.normal(k7, (16 * 128 + 5, 1), jnp.float32).astype(jnp.bfloat16)
    loss3 = jax.block_until_ready(
        wdisc_loss(d_real3, d_fake3, penalty, 10.0,
                   min_kernel_elements=0, rows_per_tile=16))
    assert jnp.allclose(loss3, _ref(d_real3, d_fake3, penalty),
                        atol=1e-3, rtol=1e-3), (loss3, _ref(d_real3, d_fake3, penalty))

    print("KERNEL_OK")
</pallas_src>

<mosaic_0001>
module attributes {stable_mosaic.version = 11 : i64} {
  func.func @_wdisc_sum_kernel(%arg0: i32, %arg1: i32, %arg2: memref<1xi32, #tpu.memory_space<smem>>, %arg3: memref<1xi32, #tpu.memory_space<smem>>, %arg4: memref<32x128xf32, #tpu.memory_space<vmem>>, %arg5: memref<32x128xf32, #tpu.memory_space<vmem>>, %arg6: memref<1x8x128xf32, #tpu.memory_space<vmem>>, %arg7: memref<1x8x128xf32, #tpu.memory_space<vmem>>) attributes {dimension_semantics = [#tpu.dimension_semantics<parallel>, #tpu.dimension_semantics<arbitrary>], iteration_bounds = array<i64: 2, 1>, scalar_prefetch = 0 : i64, scratch_operands = 0 : i64, tpu.core_type = #tpu.core_type<tc>, window_params = [{transform_indices = @transform_0, window_bounds = array<i64: 1>}, {transform_indices = @transform_1, window_bounds = array<i64: 1>}, {transform_indices = @transform_2, window_bounds = array<i64: 32, 128>}, {transform_indices = @transform_3, window_bounds = array<i64: 32, 128>}, {transform_indices = @transform_4, window_bounds = array<i64: 1, 8, 128>}, {transform_indices = @transform_5, window_bounds = array<i64: 1, 8, 128>}]} {
    %c0_i32 = arith.constant 0 : i32
    %0 = arith.cmpi eq, %arg1, %c0_i32 : i32
    %1 = arith.extui %0 : i1 to i32
    %c0_i32_0 = arith.constant 0 : i32
    %2 = arith.cmpi ne, %1, %c0_i32_0 : i32
    scf.if %2 {
      %cst_21 = arith.constant 0.000000e+00 : f32
      %33 = vector.broadcast %cst_21 : f32 to vector<1x8x128xf32>
      %c0_22 = arith.constant 0 : index
      %c0_23 = arith.constant 0 : index
      %c0_24 = arith.constant 0 : index
      %34 = vector.load %arg6[%c0_22, %c0_23, %c0_24] : memref<1x8x128xf32, #tpu.memory_space<vmem>>, vector<1x8x128xf32>
      tpu.vector_store %arg6[%c0_22, %c0_23, %c0_24], %33 {strides = array<i32>} : memref<1x8x128xf32, #tpu.memory_space<vmem>>, vector<1x8x128xf32>,
      %cst_25 = arith.constant 0.000000e+00 : f32
      %35 = vector.broadcast %cst_25 : f32 to vector<1x8x128xf32>
      %c0_26 = arith.constant 0 : index
      %c0_27 = arith.constant 0 : index
      %c0_28 = arith.constant 0 : index
      %36 = vector.load %arg7[%c0_26, %c0_27, %c0_28] : memref<1x8x128xf32, #tpu.memory_space<vmem>>, vector<1x8x128xf32>
      tpu.vector_store %arg7[%c0_26, %c0_27, %c0_28], %35 {strides = array<i32>} : memref<1x8x128xf32, #tpu.memory_space<vmem>>, vector<1x8x128xf32>,
    } else {
    }
    %c1_i32 = arith.constant 1 : i32
    %3 = arith.muli %arg0, %c1_i32 : i32
    %4 = arith.addi %3, %arg1 : i32
    %c32_i32 = arith.constant 32 : i32
    %5 = arith.muli %4, %c32_i32 : i32
    %6 = tpu.iota {dimensions = array<i32: 0>} : vector<32x128xi32>
    %7 = vector.broadcast %5 : i32 to vector<32x128xi32>
    %8 = arith.addi %7, %6 : vector<32x128xi32>
    %c0 = arith.constant 0 : index
    %c0_1 = arith.constant 0 : index
    %9 = vector.load %arg4[%c0, %c0_1] : memref<32x128xf32, #tpu.memory_space<vmem>>, vector<32x128xf32>
    %c0_2 = arith.constant 0 : index
    %c0_3 = arith.constant 0 : index
    %10 = vector.load %arg5[%c0_2, %c0_3] : memref<32x128xf32, #tpu.memory_space<vmem>>, vector<32x128xf32>
    %c0_4 = arith.constant 0 : index
    %11 = memref.load %arg2[%c0_4] : memref<1xi32, #tpu.memory_space<smem>>
    %12 = vector.broadcast %11 : i32 to vector<32x128xi32>
    %13 = arith.cmpi slt, %8, %12 : vector<32x128xi32>
    %cst = arith.constant 0.000000e+00 : f32
    %14 = vector.broadcast %cst : f32 to vector<32x128xf32>
    %15 = arith.select %13, %9, %14 : vector<32x128xi1>, vector<32x128xf32>
    %c0_5 = arith.constant 0 : index
    %16 = memref.load %arg3[%c0_5] : memref<1xi32, #tpu.memory_space<smem>>
    %17 = vector.broadcast %16 : i32 to vector<32x128xi32>
    %18 = arith.cmpi slt, %8, %17 : vector<32x128xi32>
    %cst_6 = arith.constant 0.000000e+00 : f32
    %19 = vector.broadcast %cst_6 : f32 to vector<32x128xf32>
    %20 = arith.select %18, %10, %19 : vector<32x128xi1>, vector<32x128xf32>
    %21 = vector.shape_cast %15 : vector<32x128xf32> to vector<4x8x128xf32>
    %cst_7 = arith.constant dense<0.000000e+00> : vector<8x128xf32>
    %22 = vector.multi_reduction <add>, %21, %cst_7 [0] : vector<4x8x128xf32> to vector<8x128xf32>
    %23 = vector.shape_cast %20 : vector<32x128xf32> to vector<4x8x128xf32>
    %cst_8 = arith.constant dense<0.000000e+00> : vector<8x128xf32>
    %24 = vector.multi_reduction <add>, %23, %cst_8 [0] : vector<4x8x128xf32> to vector<8x128xf32>
    %c0_9 = arith.constant 0 : index
    %c0_10 = arith.constant 0 : index
    %c0_11 = arith.constant 0 : index
    %25 = vector.load %arg6[%c0_9, %c0_10, %c0_11] : memref<1x8x128xf32, #tpu.memory_space<vmem>>, vector<1x8x128xf32>
    %26 = vector.shape_cast %22 : vector<8x128xf32> to vector<1x8x128xf32>
    %27 = arith.addf %25, %26 : vector<1x8x128xf32>
    %c0_12 = arith.constant 0 : index
    %c0_13 = arith.constant 0 : index
    %c0_14 = arith.constant 0 : index
    %28 = vector.load %arg6[%c0_12, %c0_13, %c0_14] : memref<1x8x128xf32, #tpu.memory_space<vmem>>, vector<1x8x128xf32>
    tpu.vector_store %arg6[%c0_12, %c0_13, %c0_14], %27 {strides = array<i32>} : memref<1x8x128xf32, #tpu.memory_space<vmem>>, vector<1x8x128xf32>,
    %c0_15 = arith.constant 0 : index
    %c0_16 = arith.constant 0 : index
    %c0_17 = arith.constant 0 : index
    %29 = vector.load %arg7[%c0_15, %c0_16, %c0_17] : memref<1x8x128xf32, #tpu.memory_space<vmem>>, vector<1x8x128xf32>
    %30 = vector.shape_cast %24 : vector<8x128xf32> to vector<1x8x128xf32>
    %31 = arith.addf %29, %30 : vector<1x8x128xf32>
    %c0_18 = arith.constant 0 : index
    %c0_19 = arith.constant 0 : index
    %c0_20 = arith.constant 0 : index
    %32 = vector.load %arg7[%c0_18, %c0_19, %c0_20] : memref<1x8x128xf32, #tpu.memory_space<vmem>>, vector<1x8x128xf32>
    tpu.vector_store %arg7[%c0_18, %c0_19, %c0_20], %31 {strides = array<i32>} : memref<1x8x128xf32, #tpu.memory_space<vmem>>, vector<1x8x128xf32>,
    return
  }
  func.func @transform_0(%arg0: i32, %arg1: i32) -> i32 {
    %c0_i32 = arith.constant 0 : i32
    %c0_i32_0 = arith.constant 0 : i32
    return %c0_i32 : i32
  }
  func.func @transform_1(%arg0: i32, %arg1: i32) -> i32 {
    %c0_i32 = arith.constant 0 : i32
    %c0_i32_0 = arith.constant 0 : i32
    return %c0_i32 : i32
  }
  func.func @transform_2(%arg0: i32, %arg1: i32) -> (i32, i32) {
    %c1_i32 = arith.constant 1 : i32
    %0 = arith.muli %arg0, %c1_i32 : i32
    %1 = arith.addi %0, %arg1 : i32
    %c0_i32 = arith.constant 0 : i32
    %2 = arith.minsi %1, %c0_i32 : i32
    %c0_i32_0 = arith.constant 0 : i32
    %c0_i32_1 = arith.constant 0 : i32
    return %2, %c0_i32_0 : i32, i32
  }
  func.func @transform_3(%arg0: i32, %arg1: i32) -> (i32, i32) {
    %c1_i32 = arith.constant 1 : i32
    %0 = arith.muli %arg0, %c1_i32 : i32
    %1 = arith.addi %0, %arg1 : i32
    %c0_i32 = arith.constant 0 : i32
    %2 = arith.minsi %1, %c0_i32 : i32
    %c0_i32_0 = arith.constant 0 : i32
    %c0_i32_1 = arith.constant 0 : i32
    return %2, %c0_i32_0 : i32, i32
  }
  func.func @transform_4(%arg0: i32, %arg1: i32) -> (i32, i32, i32) {
    %c0_i32 = arith.constant 0 : i32
    %c0_i32_0 = arith.constant 0 : i32
    %c0_i32_1 = arith.constant 0 : i32
    return %arg0, %c0_i32, %c0_i32_0 : i32, i32, i32
  }
  func.func @transform_5(%arg0: i32, %arg1: i32) -> (i32, i32, i32) {
    %c0_i32 = arith.constant 0 : i32
    %c0_i32_0 = arith.constant 0 : i32
    %c0_i32_1 = arith.constant 0 : i32
    return %arg0, %c0_i32, %c0_i32_0 : i32, i32, i32
  }
}

</mosaic_0001>

<llo_original>
// kernel: tpu_custom_call.1
$region0: #{tpu_custom_call.1}
  #allocation0 [shape = 'u32[]', space=smem, size = 0x4, offset = 0x4, fixed_abs, tag = 'smem constant byte address 0x4 - core index']
  #allocation1 [shape = 'u32[144,128]{1,0:T(1,128)}', space=vmem, size = 0x12000, scoped, tag = 'internal scratch']
  #allocation2 [shape = 's32[1]{0:T(128)S(6)}', space=smem, size = 0x200, scoped, tag = 'scoped memory for tpu_custom_call.1']
  #allocation3 [shape = 's32[1]{0:T(128)S(6)}', space=smem, size = 0x200, scoped, tag = 'scoped memory for tpu_custom_call.1']
  %s0 = inlined_call_operand.<no memory space> [shape: s32[1], index: 0, kind: input, shape index: {}]
  %s1 = inlined_call_operand.<no memory space> [shape: s32[1], index: 1, kind: input, shape index: {}]
  %s2 = inlined_call_operand.hbm [shape: f32[32,128], index: 2, kind: input, shape index: {}]
  %s3 = inlined_call_operand.hbm [shape: f32[32,128], index: 3, kind: input, shape index: {}]
  %s4 = inlined_call_operand.hbm [shape: f32[2,8,128], index: 4, kind: output, shape index: {0}]
  %s5 = inlined_call_operand.hbm [shape: f32[2,8,128], index: 5, kind: output, shape index: {1}]
  %6 = xla_tuple %s4, %s5
  %s7 = sld [smem:[#allocation0]]
  $region69: #{tpu_custom_call.1} parent=0
    _
  %s9 = ssub.s32 1, %s7
  %s10 = scalar_select 0, %s9, %s7
  %11 = sst [smem:[#allocation2]] %s0
  %12 = sst [smem:[#allocation3]] %s1
  $region1: #{tpu_custom_call.1} parent=0
    #allocation4 [shape = 'u8[32768]{0}', space=vmem, size = 0x8000, scoped, tag = 'input window, operand 2']
    #allocation5 [shape = 's32[2]{0}', space=sflag, size = 0x8, scoped, tag = 'scoped memory for tpu_custom_call.1']
    #allocation6 [shape = 's32[2]{0}', space=sflag, size = 0x8, scoped, tag = 'scoped memory for tpu_custom_call.1']
    #allocation7 [shape = 'u8[32768]{0}', space=vmem, size = 0x8000, scoped, tag = 'input window, operand 3']
    #allocation8 [shape = 's32[2]{0}', space=sflag, size = 0x8, scoped, tag = 'scoped memory for tpu_custom_call.1']
    #allocation9 [shape = 'u8[8192]{0}', space=vmem, size = 0x2000, scoped, tag = 'output window, operand 0']
    #allocation10 [shape = 'u8[8192]{0}', space=vmem, size = 0x2000, scoped, tag = 'output window, operand 1']
    #allocation11 [shape = 's32[2]{0}', space=sflag, size = 0x8, scoped, tag = 'scoped memory for tpu_custom_call.1']
    %13 = vsyncpa [#allocation5], 0
    %s14 = scalar_lea.sflag [#allocation5], 1
    %15 = vsyncpa %s14, 0
    %16 = vsyncpa [#allocation8], 0
    %s17 = scalar_lea.sflag [#allocation8], 1
    %18 = vsyncpa %s17, 0
    %19 = vsyncpa [#allocation6], 0
    %s20 = scalar_lea.sflag [#allocation6], 1
    %21 = vsyncpa %s20, 0
    %22 = vsyncpa [#allocation11], 0
    %s23 = scalar_lea.sflag [#allocation11], 1
    %24 = vsyncpa %s23, 0
    loop: start=0, step=1, limit=4
    $region2: #{tpu_custom_call.1} parent=1 // loop_pre_header
      _
    $region3: #{tpu_custom_call.1} parent=1 // loop_header
      %s26 = sphi 0, %s30
      %p27 = scmp.ge.s32.totalorder %s26, 4
      %s33 = sphi 0, %s45
      %s34 = sphi 0, %s41
      %s35 = sphi 0, %s33
      %s36 = sphi 0, %s34
      %s37 = sphi 0, %s35
      %s38 = sphi 0, %s36
      %s46 = sphi 0, %s46
      %s48 = sphi 0, %s46
      %s49 = sphi 0, %s48
      %s63 = sphi 0, %s49
      %s67 = sphi 0, %s67
      %s69 = sphi 0, %s67
      %s70 = sphi 0, %s69
      %s84 = sphi 0, %s70
      %s96 = sphi 0, %s98
      %s99 = sphi 0, %s96
      %s100 = sphi 0, %s99
      %s116 = sphi 0, %s100
      %s128 = sphi 0, %s130
      %s131 = sphi 0, %s128
      %s132 = sphi 0, %s131
      %s148 = sphi 0, %s132
      %s154 = sphi 0, %s156
      %s157 = sphi 0, %s154
      %s158 = sphi 0, %s157
      %s174 = sphi 0, %s158
      %s180 = sphi 0, %s182
      %s183 = sphi 0, %s180
      %s184 = sphi 0, %s183
      %s200 = sphi 0, %s184
    $region4: #{tpu_custom_call.1} parent=1 // loop_header_branch
      %29 = sbr.rel (%p27) target = $region8
    $region5: #{tpu_custom_call.1} parent=1 // loop_body
      %s31 = ssub.s32 %s26, 1
      %s32 = ssub.s32 %s26, 2
      %s39 = sadd.s32 1, %s34
      %p40 = scmp.ge.s32.totalorder %s39, 1
      %s41 = scalar_select %p40, 0, %s39
      %s42 = sadd.s32 1, %s33
      %s43 = scalar_select %p40, %s42, %s33
      %p44 = scmp.ge.s32.totalorder %s43, 2
      %s45 = scalar_select %p44, 0, %s43
      %s47 = sadd.s32 %s46, 1
      %p50 = scmp.eq.s32.totalorder %s26, 1
      %p51 = scmp.ne.s32.totalorder %s46, %s48
      %p52 = scmp.eq.s32.totalorder %s26, 0
      %p53 = por %p51, %p52
      %p54 = scmp.ne.s32.totalorder %s46, %s48
      %p55 = scmp.eq.s32.totalorder %s31, 1
      %p56 = por %p54, %p55
      %p57 = scmp.ne.s32.totalorder %s48, %s49
      %p58 = scmp.eq.s32.totalorder %s31, 0
      %p59 = por %p57, %p58
      %p60 = scmp.ne.s32.totalorder %s48, %s49
      %p61 = scmp.eq.s32.totalorder %s32, 1
      %p62 = por %p60, %p61
      %p64 = scmp.ne.s32.totalorder %s49, %s63
      %p65 = scmp.eq.s32.totalorder %s32, 0
      %p66 = por %p64, %p65
      %s68 = sadd.s32 %s67, 1
      %p71 = scmp.eq.s32.totalorder %s26, 1
      %p72 = scmp.ne.s32.totalorder %s67, %s69
      %p73 = scmp.eq.s32.totalorder %s26, 0
      %p74 = por %p72, %p73
      %p75 = scmp.ne.s32.totalorder %s67, %s69
      %p76 = scmp.eq.s32.totalorder %s31, 1
      %p77 = por %p75, %p76
      %p78 = scmp.ne.s32.totalorder %s69, %s70
      %p79 = scmp.eq.s32.totalorder %s31, 0
      %p80 = por %p78, %p79
      %p81 = scmp.ne.s32.totalorder %s69, %s70
      %p82 = scmp.eq.s32.totalorder %s32, 1
      %p83 = por %p81, %p82
      %p85 = scmp.ne.s32.totalorder %s70, %s84
      %p86 = scmp.eq.s32.totalorder %s32, 0
      %p87 = por %p85, %p86
      %s88 = sadd.s32 %s33, %s34
      %p89 = scmp.lt.s32.totalorder %s88, 0
      %s90 = scalar_select %p89, %s88, 0
      %s91 = sadd.s32 %s45, %s41
      %p92 = scmp.lt.s32.totalorder %s91, 0
      %s93 = scalar_select %p92, %s91, 0
      %s94 = ssub.s32 %s90, %s93
      %p95 = scmp.eq.s32.totalorder %s94, 0
      %s97 = sadd.s32 %s96, 1
      %s98 = scalar_select %p95, %s96, %s97
      %p101 = pneg %p95
      %p102 = scmp.eq.s32.totalorder %s26, 1
      %p103 = por %p101, %p102
      %p104 = scmp.ne.s32.totalorder %s96, %s99
      %p105 = scmp.eq.s32.totalorder %s26, 0
      %p106 = por %p104, %p105
      %p107 = scmp.ne.s32.totalorder %s96, %s99
      %p108 = scmp.eq.s32.totalorder %s31, 1
      %p109 = por %p107, %p108
      %p110 = scmp.ne.s32.totalorder %s99, %s100
      %p111 = scmp.eq.s32.totalorder %s31, 0
      %p112 = por %p110, %p111
      %p113 = scmp.ne.s32.totalorder %s99, %s100
      %p114 = scmp.eq.s32.totalorder %s32, 1
      %p115 = por %p113, %p114
      %p117 = scmp.ne.s32.totalorder %s100, %s116
      %p118 = scmp.eq.s32.totalorder %s32, 0
      %p119 = por %p117, %p118
      %s120 = sadd.s32 %s33, %s34
      %p121 = scmp.lt.s32.totalorder %s120, 0
      %s122 = scalar_select %p121, %s120, 0
      %s123 = sadd.s32 %s45, %s41
      %p124 = scmp.lt.s32.totalorder %s123, 0
      %s125 = scalar_select %p124, %s123, 0
      %s126 = ssub.s32 %s122, %s125
      %p127 = scmp.eq.s32.totalorder %s126, 0
      %s129 = sadd.s32 %s128, 1
      %s130 = scalar_select %p127, %s128, %s129
      %p133 = pneg %p127
      %p134 = scmp.eq.s32.totalorder %s26, 1
      %p135 = por %p133, %p134
      %p136 = scmp.ne.s32.totalorder %s128, %s131
      %p137 = scmp.eq.s32.totalorder %s26, 0
      %p138 = por %p136, %p137
      %p139 = scmp.ne.s32.totalorder %s128, %s131
      %p140 = scmp.eq.s32.totalorder %s31, 1
      %p141 = por %p139, %p140
      %p142 = scmp.ne.s32.totalorder %s131, %s132
      %p143 = scmp.eq.s32.totalorder %s31, 0
      %p144 = por %p142, %p143
      %p145 = scmp.ne.s32.totalorder %s131, %s132
      %p146 = scmp.eq.s32.totalorder %s32, 1
      %p147 = por %p145, %p146
      %p149 = scmp.ne.s32.totalorder %s132, %s148
      %p150 = scmp.eq.s32.totalorder %s32, 0
      %p151 = por %p149, %p150
      %s152 = ssub.s32 %s33, %s45
      %p153 = scmp.eq.s32.totalorder %s152, 0
      %s155 = sadd.s32 %s154, 1
      %s156 = scalar_select %p153, %s154, %s155
      %p159 = pneg %p153
      %p160 = scmp.eq.s32.totalorder %s26, 1
      %p161 = por %p159, %p160
      %p162 = scmp.ne.s32.totalorder %s154, %s157
      %p163 = scmp.eq.s32.totalorder %s26, 0
      %p164 = por %p162, %p163
      %p165 = scmp.ne.s32.totalorder %s154, %s157
      %p166 = scmp.eq.s32.totalorder %s31, 1
      %p167 = por %p165, %p166
      %p168 = scmp.ne.s32.totalorder %s157, %s158
      %p169 = scmp.eq.s32.totalorder %s31, 0
      %p170 = por %p168, %p169
      %p171 = scmp.ne.s32.totalorder %s157, %s158
      %p172 = scmp.eq.s32.totalorder %s32, 1
      %p173 = por %p171, %p172
      %p175 = scmp.ne.s32.totalorder %s158, %s174
      %p176 = scmp.eq.s32.totalorder %s32, 0
      %p177 = por %p175, %p176
      %s178 = ssub.s32 %s33, %s45
      %p179 = scmp.eq.s32.totalorder %s178, 0
      %s181 = sadd.s32 %s180, 1
      %s182 = scalar_select %p179, %s180, %s181
      %p185 = pneg %p179
      %p186 = scmp.eq.s32.totalorder %s26, 1
      %p187 = por %p185, %p186
      %p188 = scmp.ne.s32.totalorder %s180, %s183
      %p189 = scmp.eq.s32.totalorder %s26, 0
      %p190 = por %p188, %p189
      %p191 = scmp.ne.s32.totalorder %s180, %s183
      %p192 = scmp.eq.s32.totalorder %s31, 1
      %p193 = por %p191, %p192
      %p194 = scmp.ne.s32.totalorder %s183, %s184
      %p195 = scmp.eq.s32.totalorder %s31, 0
      %p196 = por %p194, %p195
      %p197 = scmp.ne.s32.totalorder %s183, %s184
      %p198 = scmp.eq.s32.totalorder %s32, 1
      %p199 = por %p197, %p198
      %p201 = scmp.ne.s32.totalorder %s184, %s200
      %p202 = scmp.eq.s32.totalorder %s32, 0
      %p203 = por %p201, %p202
      %p204 = scmp.le.s32.totalorder 1, %s26
      %p205 = scmp.lt.s32.totalorder %s26, 3
      %p206 = pnand %p204, %p205
      %p207 = pneg %p206
      // Predicated region
      $region9: #{tpu_custom_call.1} parent=5 // pred_check
        _
      $region10: #{tpu_custom_call.1} parent=5 // pred_check_branch
        %209 = sbr.rel (%p206) target = $region12
      $region11: #{tpu_custom_call.1} parent=5 // pred_region
        %s210 = ssub.s32 %s26, 1
        // Predicated region
        $region13: #{tpu_custom_call.1} parent=11 // pred_check
          %p211 = pneg %p59
        $region14: #{tpu_custom_call.1} parent=11 // pred_check_branch
          %213 = sbr.rel (%p211) target = $region16
        $region15: #{tpu_custom_call.1} parent=11 // pred_region
          _
        $region16: #{tpu_custom_call.1} parent=11 // pred_fallthru
          _
        // Predicated region
        $region17: #{tpu_custom_call.1} parent=11 // pred_check
          %p214 = pneg %p80
        $region18: #{tpu_custom_call.1} parent=11 // pred_check_branch
          %216 = sbr.rel (%p214) target = $region20
        $region19: #{tpu_custom_call.1} parent=11 // pred_region
          _
        $region20: #{tpu_custom_call.1} parent=11 // pred_fallthru
          _
      $region12: #{tpu_custom_call.1} parent=5 // pred_fallthru
        _
      %p217 = scmp.lt.s32.totalorder %s26, 2
      // Predicated region
      $region21: #{tpu_custom_call.1} parent=5 // pred_check
        %p218 = pneg %p217
      $region22: #{tpu_custom_call.1} parent=5 // pred_check_branch
        %220 = sbr.rel (%p218) target = $region24
      $region23: #{tpu_custom_call.1} parent=5 // pred_region
        // Predicated region
        $region25: #{tpu_custom_call.1} parent=23 // pred_check
          %p221 = pneg %p106
        $region26: #{tpu_custom_call.1} parent=23 // pred_check_branch
          %223 = sbr.rel (%p221) target = $region28
        $region27: #{tpu_custom_call.1} parent=23 // pred_region
          %s224 = sand.u32 %s96, 1
          %s225 = scalar_lea.sflag [#allocation5], %s224
          %s226 = sand.u32 %s96, 1
          %s227 = smul.addr %s226, 32
          %s228 = scalar_lea.vmem [#allocation4], %s227
          %s229 = sadd.s32 %s33, %s34
          %p230 = scmp.lt.s32.totalorder %s229, 0
          %s231 = scalar_select %p230, %s229, 0
          %s232 = smul.u32 4, %s231
          %s234 = ssub.s32 512, 512
          %235 = vsyncadd %s225, %s234
          %s236 = smul.addr %s232, 128
          %s237 = scalar_lea.hbm %s2, %s236
          %s238 = sshll.u32 %s228, 4
          %s239 = int_to_ptr.vmem [resolvable:$true] %s238
          %244 = dma.hbm_to_vmem [thread:$0]  %s237, 512, %s239, %s225, 128, 128, 8
        $region28: #{tpu_custom_call.1} parent=23 // pred_fallthru
          _
        // Predicated region
        $region29: #{tpu_custom_call.1} parent=23 // pred_check
          %p245 = pneg %p138
        $region30: #{tpu_custom_call.1} parent=23 // pred_check_branch
          %247 = sbr.rel (%p245) target = $region32
        $region31: #{tpu_custom_call.1} parent=23 // pred_region
          %s248 = sand.u32 %s128, 1
          %s249 = scalar_lea.sflag [#allocation8], %s248
          %s250 = sand.u32 %s128, 1
          %s251 = smul.addr %s250, 32
          %s252 = scalar_lea.vmem [#allocation7], %s251
          %s253 = sadd.s32 %s33, %s34
          %p254 = scmp.lt.s32.totalorder %s253, 0
          %s255 = scalar_select %p254, %s253, 0
          %s256 = smul.u32 4, %s255
          %s258 = ssub.s32 512, 512
          %259 = vsyncadd %s249, %s258
          %s260 = smul.addr %s256, 128
          %s261 = scalar_lea.hbm %s3, %s260
          %s262 = sshll.u32 %s252, 4
          %s263 = int_to_ptr.vmem [resolvable:$true] %s262
          %268 = dma.hbm_to_vmem [thread:$0]  %s261, 512, %s263, %s249, 128, 128, 8
        $region32: #{tpu_custom_call.1} parent=23 // pred_fallthru
          _
      $region24: #{tpu_custom_call.1} parent=5 // pred_fallthru
        _
      %p269 = scmp.le.s32.totalorder 1, %s26
      %p270 = scmp.lt.s32.totalorder %s26, 3
      %p271 = pnand %p269, %p270
      %p272 = pneg %p271
      // Predicated region
      $region33: #{tpu_custom_call.1} parent=5 // pred_check
        _
      $region34: #{tpu_custom_call.1} parent=5 // pred_check_branch
        %274 = sbr.rel (%p271) target = $region36
      $region35: #{tpu_custom_call.1} parent=5 // pred_region
        %s275 = ssub.s32 %s26, 1
        %s276 = sand.u32 %s99, 1
        %s277 = scalar_lea.sflag [#allocation5], %s276
        %s278 = sand.u32 %s99, 1
        %s279 = smul.addr %s278, 32
        %s280 = scalar_lea.vmem [#allocation4], %s279
        // Predicated region
        $region37: #{tpu_custom_call.1} parent=35 // pred_check
          %p281 = pneg %p112
        $region38: #{tpu_custom_call.1} parent=35 // pred_check_branch
          %283 = sbr.rel (%p281) target = $region40
        $region39: #{tpu_custom_call.1} parent=35 // pred_region
          %284 = dma.done %s277, 512
        $region40: #{tpu_custom_call.1} parent=35 // pred_fallthru
          _
        %s285 = sand.u32 %s131, 1
        %s286 = scalar_lea.sflag [#allocation8], %s285
        %s287 = sand.u32 %s131, 1
        %s288 = smul.addr %s287, 32
        %s289 = scalar_lea.vmem [#allocation7], %s288
        // Predicated region
        $region41: #{tpu_custom_call.1} parent=35 // pred_check
          %p290 = pneg %p144
        $region42: #{tpu_custom_call.1} parent=35 // pred_check_branch
          %292 = sbr.rel (%p290) target = $region44
        $region43: #{tpu_custom_call.1} parent=35 // pred_region
          %293 = dma.done %s286, 512
        $region44: #{tpu_custom_call.1} parent=35 // pred_fallthru
          _
        %p294 = pneg %p59
        %p295 = pneg %p56
        %p296 = pneg %p80
        %p297 = pneg %p77
        %s298 = sand.u32 %s99, 1
        %s299 = scalar_lea.sflag [#allocation5], %s298
        %s300 = sand.u32 %s99, 1
        %s301 = smul.addr %s300, 32
        %s302 = scalar_lea.vmem [#allocation4], %s301
        %p303 = pneg %p112
        %p304 = pneg %p109
        %s305 = sand.u32 %s131, 1
        %s306 = scalar_lea.sflag [#allocation8], %s305
        %s307 = sand.u32 %s131, 1
        %s308 = smul.addr %s307, 32
        %s309 = scalar_lea.vmem [#allocation7], %s308
        %p310 = pneg %p144
        %p311 = pneg %p141
        %p312 = pneg %p170
        %p313 = pneg %p167
        %s314 = sand.u32 %s157, 1
        %s315 = scalar_lea.sflag [#allocation6], %s314
        %s316 = sand.u32 %s157, 1
        %s317 = smul.addr %s316, 8
        %s318 = scalar_lea.vmem [#allocation9], %s317
        %p319 = pneg %p196
        %p320 = pneg %p193
        %s321 = sand.u32 %s183, 1
        %s322 = scalar_lea.sflag [#allocation11], %s321
        %s323 = sand.u32 %s183, 1
        %s324 = smul.addr %s323, 8
        %s325 = scalar_lea.vmem [#allocation10], %s324
        %s326 = sadd.s32 %s35, %s36
        %p327 = scmp.lt.s32.totalorder %s326, 0
        %s328 = scalar_select %p327, %s326, 0
        %s329 = smul.u32 4, %s328
        %s330 = sadd.s32 %s35, %s36
        %p331 = scmp.lt.s32.totalorder %s330, 0
        %s332 = scalar_select %p331, %s330, 0
        %s333 = smul.u32 4, %s332
        %p334 = scmp.eq.s32.totalorder %s36, 0
        // Predicated region
        $region45: #{tpu_custom_call.1} parent=35 // pred_check
          %p335 = pneg %p334
        $region46: #{tpu_custom_call.1} parent=35 // pred_check_branch
          %337 = sbr.rel (%p335) target = $region48
        $region47: #{tpu_custom_call.1} parent=35 // pred_region
          %338 = vst [vmem:[%s318] sm:$0xff] 0.0
          %339 = vst [vmem:[%s325] sm:$0xff] 0.0
        $region48: #{tpu_custom_call.1} parent=35 // pred_fallthru
          _
        %s340 = sadd.s32 %s35, %s36
        %s341 = smul.u32 %s340, 32
        %v342 = vlaneseq
        %v343 = vshrl.u32 %v342, 7
        %v344 = vadd.s32 %v343, 8
        %v345 = vadd.s32 %v343, 16
        %v346 = vadd.s32 %v343, 24
        %v347 = vstv %s341
        %v348 = vadd.s32 %v347, %v343
        %v349 = vadd.s32 %v347, %v344
        %v350 = vadd.s32 %v347, %v345
        %v351 = vadd.s32 %v347, %v346
        %v352 = vld [vmem:[%s280] sm:$0xff]
        %v353 = vld [vmem:[%s280 + $0x8] sm:$0xff]
        %v354 = vld [vmem:[%s280 + $0x10] sm:$0xff]
        %v355 = vld [vmem:[%s280 + $0x18] sm:$0xff]
        %v356 = vld [vmem:[%s289] sm:$0xff]
        %v357 = vld [vmem:[%s289 + $0x8] sm:$0xff]
        %v358 = vld [vmem:[%s289 + $0x10] sm:$0xff]
        %v359 = vld [vmem:[%s289 + $0x18] sm:$0xff]
        %s360 = sld [smem:[#allocation2]]
        %v361 = vstv %s360
        %vm362 = vcmp.lt.s32.totalorder %v348, %v361
        %vm363 = vcmp.lt.s32.totalorder %v349, %v361
        %vm364 = vcmp.lt.s32.totalorder %v350, %v361
        %vm365 = vcmp.lt.s32.totalorder %v351, %v361
        %v366 = vsel %vm362, %v352, 0.0
        %v367 = vsel %vm363, %v353, 0.0
        %v368 = vsel %vm364, %v354, 0.0
        %v369 = vsel %vm365, %v355, 0.0
        %s370 = sld [smem:[#allocation3]]
        %v371 = vstv %s370
        %vm372 = vcmp.lt.s32.totalorder %v348, %v371
        %vm373 = vcmp.lt.s32.totalorder %v349, %v371
        %vm374 = vcmp.lt.s32.totalorder %v350, %v371
        %vm375 = vcmp.lt.s32.totalorder %v351, %v371
        %v376 = vsel %vm372, %v356, 0.0
        %v377 = vsel %vm373, %v357, 0.0
        %v378 = vsel %vm374, %v358, 0.0
        %v379 = vsel %vm375, %v359, 0.0
        %v380 = vadd.f32 %v366, %v367
        %v381 = vadd.f32 %v380, %v368
        %v382 = vadd.f32 %v381, %v369
        %v383 = vadd.f32 %v376, %v377
        %v384 = vadd.f32 %v383, %v378
        %v385 = vadd.f32 %v384, %v379
        %v386 = vld [vmem:[%s318] sm:$0xff]
        %v387 = vadd.f32 %v386, %v382
        %388 = vst [vmem:[%s318] sm:$0xff] %v387
        %v389 = vld [vmem:[%s325] sm:$0xff]
        %v390 = vadd.f32 %v389, %v385
        %391 = vst [vmem:[%s325] sm:$0xff] %v390
        %s392 = sand.u32 %s157, 1
        %s393 = scalar_lea.sflag [#allocation6], %s392
        %s394 = sand.u32 %s157, 1
        %s395 = smul.addr %s394, 8
        %s396 = scalar_lea.vmem [#allocation9], %s395
        %s397 = sand.u32 %s183, 1
        %s398 = scalar_lea.sflag [#allocation11], %s397
        %s399 = sand.u32 %s183, 1
        %s400 = smul.addr %s399, 8
        %s401 = scalar_lea.vmem [#allocation10], %s400
        // Predicated region
        $region49: #{tpu_custom_call.1} parent=35 // pred_check
          %p402 = pneg %p167
        $region50: #{tpu_custom_call.1} parent=35 // pred_check_branch
          %404 = sbr.rel (%p402) target = $region52
        $region51: #{tpu_custom_call.1} parent=35 // pred_region
          %s406 = ssub.s32 128, 128
          %407 = vsyncadd %s393, %s406
          %s408 = smul.addr %s35, 128
          %s409 = scalar_lea.hbm %s4, %s408
          %s411 = sshll.u32 %s396, 4
          %s412 = int_to_ptr.vmem [resolvable:$true] %s411
          %414 = dma.vmem_to_hbm [thread:$0]  %s412, 128, %s409, %s393
        $region52: #{tpu_custom_call.1} parent=35 // pred_fallthru
          _
        // Predicated region
        $region53: #{tpu_custom_call.1} parent=35 // pred_check
          %p415 = pneg %p193
        $region54: #{tpu_custom_call.1} parent=35 // pred_check_branch
          %417 = sbr.rel (%p415) target = $region56
        $region55: #{tpu_custom_call.1} parent=35 // pred_region
          %s419 = ssub.s32 128, 128
          %420 = vsyncadd %s398, %s419
          %s421 = smul.addr %s35, 128
          %s422 = scalar_lea.hbm %s5, %s421
          %s424 = sshll.u32 %s401, 4
          %s425 = int_to_ptr.vmem [resolvable:$true] %s424
          %427 = dma.vmem_to_hbm [thread:$0]  %s425, 128, %s422, %s398
        $region56: #{tpu_custom_call.1} parent=35 // pred_fallthru
          _
      $region36: #{tpu_custom_call.1} parent=5 // pred_fallthru
        _
      %p428 = scmp.le.s32.totalorder 2, %s26
      // Predicated region
      $region57: #{tpu_custom_call.1} parent=5 // pred_check
        %p429 = pneg %p428
      $region58: #{tpu_custom_call.1} parent=5 // pred_check_branch
        %431 = sbr.rel (%p429) target = $region60
      $region59: #{tpu_custom_call.1} parent=5 // pred_region
        %s432 = ssub.s32 %s26, 2
        // Predicated region
        $region61: #{tpu_custom_call.1} parent=59 // pred_check
          %p433 = pneg %p173
        $region62: #{tpu_custom_call.1} parent=59 // pred_check_branch
          %435 = sbr.rel (%p433) target = $region64
        $region63: #{tpu_custom_call.1} parent=59 // pred_region
          %s436 = sand.u32 %s158, 1
          %s437 = scalar_lea.sflag [#allocation6], %s436
          %s438 = sand.u32 %s158, 1
          %s439 = smul.addr %s438, 8
          %s440 = scalar_lea.vmem [#allocation9], %s439
          %441 = dma.done %s437, 128
        $region64: #{tpu_custom_call.1} parent=59 // pred_fallthru
          _
        // Predicated region
        $region65: #{tpu_custom_call.1} parent=59 // pred_check
          %p442 = pneg %p199
        $region66: #{tpu_custom_call.1} parent=59 // pred_check_branch
          %444 = sbr.rel (%p442) target = $region68
        $region67: #{tpu_custom_call.1} parent=59 // pred_region
          %s445 = sand.u32 %s184, 1
          %s446 = scalar_lea.sflag [#allocation11], %s445
          %s447 = sand.u32 %s184, 1
          %s448 = smul.addr %s447, 8
          %s449 = scalar_lea.vmem [#allocation10], %s448
          %450 = dma.done %s446, 128
        $region68: #{tpu_custom_call.1} parent=59 // pred_fallthru
          _
      $region60: #{tpu_custom_call.1} parent=5 // pred_fallthru
        _
    $region6: #{tpu_custom_call.1} parent=1 // loop_footer
      %s30 = sadd.s32 1, %s26
    $region7: #{tpu_custom_call.1} parent=1 // loop_footer_branch
      %25 = sbr.rel target = $region3
    $region8: #{tpu_custom_call.1} parent=1 // loop_exit
      _
    %451 = vsyncpa [#allocation5], 1
    %s452 = scalar_lea.sflag [#allocation5], 1
    %453 = vsyncpa %s452, 1
    %454 = vsyncpa [#allocation8], 1
    %s455 = scalar_lea.sflag [#allocation8], 1
    %456 = vsyncpa %s455, 1
    %457 = vsyncpa [#allocation6], 1
    %s458 = scalar_lea.sflag [#allocation6], 1
    %459 = vsyncpa %s458, 1
    %460 = vsyncpa [#allocation11], 1
    %s461 = scalar_lea.sflag [#allocation11], 1
    %462 = vsyncpa %s461, 1

</llo_original>
